<compile_context>
chip_gen: v7x
topology: tpu7x:2x2x1
jax: 0.10.0
libtpu: 0.0.40
codegen_flags: <defaults>
</compile_context>

<pallas_src>
import functools

import jax
import jax.numpy as jnp
from jax.experimental import pallas as pl
from jax.experimental.pallas import tpu as pltpu

_BN_EPS = 1e-5


# ------------------------------ Pallas kernel ------------------------------ #

def _basic_block_kernel(x_ref, w1_ref, w2_ref, s1_ref, b1_ref, s2_ref, b2_ref,
                        out_ref, relu_ref, *, H, W):
    """Fused conv3x3+bn+relu -> conv3x3+bn -> +residual -> relu, one image."""
    HW = H * W
    x2d = x_ref[0]                                        # (C, H*W), lanes = H*W

    # Per-column validity masks for the horizontal taps.  Vertical padding is
    # handled by the zero lanes concatenated before/after the flattened image.
    col = jax.lax.broadcasted_iota(jnp.int32, (1, HW), 1) % W
    left_ok = col >= 1            # tap dw=0 reads source column w-1
    right_ok = col <= W - 2       # tap dw=2 reads source column w+1

    def conv3x3(inp, w2d):
        cin = inp.shape[0]
        zpad = jnp.zeros((cin, W + 1), inp.dtype)
        buf = jnp.concatenate([zpad, inp, zpad], axis=1)  # (cin, HW + 2W + 2)
        taps = []
        for dh in range(3):
            for dw in range(3):
                start = dh * W + dw                        # source (h+dh-1, w+dw-1)
                t = buf[:, start:start + HW]
                if dw == 0:
                    t = jnp.where(left_ok, t, 0.0)
                elif dw == 2:
                    t = jnp.where(right_ok, t, 0.0)
                taps.append(t)
        patches = jnp.concatenate(taps, axis=0)            # (9*cin, HW)
        # Single MXU matmul, K = 9*cin, lane-dense N = HW.
        return jnp.dot(w2d, patches, preferred_element_type=jnp.float32)

    # conv1 + bn1 + relu  (h stays on-chip)
    h = conv3x3(x2d, w1_ref[...]) * s1_ref[...] + b1_ref[...]
    h = jnp.maximum(h, 0.0)

    # conv2 + bn2 + residual add
    out = conv3x3(h, w2_ref[...]) * s2_ref[...] + b2_ref[...] + x2d

    out_ref[0] = out.astype(out_ref.dtype)
    relu_ref[0] = jnp.maximum(out, 0.0).astype(relu_ref.dtype)


# -------------------------------- Wrappers ---------------------------------- #

def _fold_bn(gamma, beta, mean, var):
    scale = gamma / jnp.sqrt(var + _BN_EPS)
    bias = beta - mean * scale
    return (scale.reshape(-1, 1).astype(jnp.float32),
            bias.reshape(-1, 1).astype(jnp.float32))


def _weight_to_2d(w_hwio):
    """HWIO (3,3,Cin,Cout) -> (Cout, 9*Cin); rows ordered (dh, dw, cin)."""
    cout = w_hwio.shape[-1]
    return jnp.transpose(w_hwio, (3, 0, 1, 2)).reshape(cout, -1)


def basic_block_forward(x_nchw, params):
    """Pallas implementation of BasicBlock.forward. Returns (relu_out, out), NCHW."""
    N, C, H, W = x_nchw.shape
    HW = H * W
    x_flat = x_nchw.reshape(N, C, HW)          # free row-major flatten (stays NCHW)

    w1 = _weight_to_2d(params["w1"])
    w2 = _weight_to_2d(params["w2"])
    s1, b1 = _fold_bn(params["bn1_gamma"], params["bn1_beta"],
                      params["bn1_mean"], params["bn1_var"])
    s2, b2 = _fold_bn(params["bn2_gamma"], params["bn2_beta"],
                      params["bn2_mean"], params["bn2_var"])

    kernel = functools.partial(_basic_block_kernel, H=H, W=W)
    out_flat, relu_flat = pl.pallas_call(
        kernel,
        out_shape=(jax.ShapeDtypeStruct((N, C, HW), jnp.float32),   # out (pre-ReLU)
                   jax.ShapeDtypeStruct((N, C, HW), jnp.float32)),  # relu(out)
        grid_spec=pltpu.PrefetchScalarGridSpec(
            num_scalar_prefetch=0,
            grid=(N,),
            in_specs=[
                pl.BlockSpec((1, C, HW), lambda n: (n, 0, 0)),   # x
                pl.BlockSpec((C, 9 * C), lambda n: (0, 0)),      # w1 (Cout, 9*Cin)
                pl.BlockSpec((C, 9 * C), lambda n: (0, 0)),      # w2
                pl.BlockSpec((C, 1), lambda n: (0, 0)),          # bn1 scale
                pl.BlockSpec((C, 1), lambda n: (0, 0)),          # bn1 bias
                pl.BlockSpec((C, 1), lambda n: (0, 0)),          # bn2 scale
                pl.BlockSpec((C, 1), lambda n: (0, 0)),          # bn2 bias
            ],
            out_specs=[
                pl.BlockSpec((1, C, HW), lambda n: (n, 0, 0)),
                pl.BlockSpec((1, C, HW), lambda n: (n, 0, 0)),
            ],
        ),
        compiler_params=pltpu.CompilerParams(
            dimension_semantics=("parallel",)),                 # 2 TCs on v7x
    )(x_flat, w1, w2, s1, b1, s2, b2)

    out = out_flat.reshape(N, C, H, W)
    relu_out = relu_flat.reshape(N, C, H, W)
    return relu_out, out


# --------------------------- Pure-JAX reference ------------------------------ #

def _ref_forward(x_nchw, params):
    x = jnp.transpose(x_nchw, (0, 2, 3, 1))
    dn = ("NHWC", "HWIO", "NHWC")

    def conv_bn(h, w, g, b, m, v):
        y = jax.lax.conv_general_dilated(h, w, (1, 1), "SAME",
                                         dimension_numbers=dn)
        return (y - m) / jnp.sqrt(v + _BN_EPS) * g + b

    h = conv_bn(x, params["w1"], params["bn1_gamma"], params["bn1_beta"],
                params["bn1_mean"], params["bn1_var"])
    h = jnp.maximum(h, 0.0)
    out = conv_bn(h, params["w2"], params["bn2_gamma"], params["bn2_beta"],
                  params["bn2_mean"], params["bn2_var"])
    out = out + x
    relu_out = jnp.maximum(out, 0.0)
    return (jnp.transpose(relu_out, (0, 3, 1, 2)),
            jnp.transpose(out, (0, 3, 1, 2)))


# ----------------------------------- Main ------------------------------------ #

if __name__ == "__main__":
    N, C, H, W = 2, 8, 16, 16        # inplanes == planes (stride=1, no downsample)
    key = jax.random.PRNGKey(0)
    ks = jax.random.split(key, 8)

    params = {
        "w1": 0.1 * jax.random.normal(ks[0], (3, 3, C, C), jnp.float32),
        "w2": 0.1 * jax.random.normal(ks[1], (3, 3, C, C), jnp.float32),
        "bn1_gamma": 1.0 + 0.1 * jax.random.normal(ks[2], (C,), jnp.float32),
        "bn1_beta": 0.1 * jax.random.normal(ks[3], (C,), jnp.float32),
        "bn1_mean": 0.05 * jax.random.normal(ks[4], (C,), jnp.float32),
        "bn1_var": jnp.abs(1.0 + 0.1 * jax.random.normal(ks[5], (C,), jnp.float32)),
        "bn2_gamma": 1.0 + 0.1 * jax.random.normal(ks[6], (C,), jnp.float32),
        "bn2_beta": 0.1 * jax.random.normal(ks[7], (C,), jnp.float32),
        "bn2_mean": jnp.zeros((C,), jnp.float32),
        "bn2_var": jnp.ones((C,), jnp.float32),
    }

    x = jax.random.normal(jax.random.PRNGKey(42), (N, C, H, W), jnp.float32)

    relu_out, out = jax.block_until_ready(basic_block_forward(x, params))
    ref_relu, ref_out = jax.block_until_ready(_ref_forward(x, params))

    assert relu_out.shape == (N, C, H, W) and out.shape == (N, C, H, W)
    assert jnp.allclose(out, ref_out, atol=1e-4, rtol=1e-4)
    assert jnp.allclose(relu_out, ref_relu, atol=1e-4, rtol=1e-4)

    print("KERNEL_OK")
</pallas_src>

<mosaic_0001>
module attributes {stable_mosaic.version = 11 : i64} {
  func.func @_basic_block_kernel(%arg0: i32, %arg1: memref<1x8x256xf32, #tpu.memory_space<vmem>>, %arg2: memref<8x72xf32, #tpu.memory_space<vmem>>, %arg3: memref<8x72xf32, #tpu.memory_space<vmem>>, %arg4: memref<8x1xf32, #tpu.memory_space<vmem>>, %arg5: memref<8x1xf32, #tpu.memory_space<vmem>>, %arg6: memref<8x1xf32, #tpu.memory_space<vmem>>, %arg7: memref<8x1xf32, #tpu.memory_space<vmem>>, %arg8: memref<1x8x256xf32, #tpu.memory_space<vmem>>, %arg9: memref<1x8x256xf32, #tpu.memory_space<vmem>>) attributes {dimension_semantics = [#tpu.dimension_semantics<parallel>], iteration_bounds = array<i64: 2>, scalar_prefetch = 0 : i64, scratch_operands = 0 : i64, tpu.core_type = #tpu.core_type<tc>, window_params = [{transform_indices = @transform_0, window_bounds = array<i64: 1, 8, 256>}, {pipeline_mode = #tpu.pipeline_mode<synchronous>, transform_indices = @transform_1, window_bounds = array<i64: 8, 72>}, {pipeline_mode = #tpu.pipeline_mode<synchronous>, transform_indices = @transform_2, window_bounds = array<i64: 8, 72>}, {pipeline_mode = #tpu.pipeline_mode<synchronous>, transform_indices = @transform_3, window_bounds = array<i64: 8, 1>}, {pipeline_mode = #tpu.pipeline_mode<synchronous>, transform_indices = @transform_4, window_bounds = array<i64: 8, 1>}, {pipeline_mode = #tpu.pipeline_mode<synchronous>, transform_indices = @transform_5, window_bounds = array<i64: 8, 1>}, {pipeline_mode = #tpu.pipeline_mode<synchronous>, transform_indices = @transform_6, window_bounds = array<i64: 8, 1>}, {transform_indices = @transform_7, window_bounds = array<i64: 1, 8, 256>}, {transform_indices = @transform_8, window_bounds = array<i64: 1, 8, 256>}]} {
    %c0 = arith.constant 0 : index
    %c0_0 = arith.constant 0 : index
    %c0_1 = arith.constant 0 : index
    %0 = vector.load %arg1[%c0, %c0_0, %c0_1] : memref<1x8x256xf32, #tpu.memory_space<vmem>>, vector<1x8x256xf32>
    %1 = vector.shape_cast %0 : vector<1x8x256xf32> to vector<8x256xf32>
    %2 = tpu.iota {dimensions = array<i32: 1>} : vector<1x256xi32>
    %c16_i32 = arith.constant 16 : i32
    %c0_i32 = arith.constant 0 : i32
    %3 = arith.cmpi eq, %c16_i32, %c0_i32 : i32
    %c1_i32 = arith.constant 1 : i32
    %4 = arith.select %3, %c1_i32, %c16_i32 : i32
    %5 = vector.broadcast %4 : i32 to vector<1x256xi32>
    %6 = arith.remsi %2, %5 : vector<1x256xi32>
    %c0_i32_2 = arith.constant 0 : i32
    %7 = vector.broadcast %c0_i32_2 : i32 to vector<1x256xi32>
    %8 = arith.cmpi ne, %6, %7 : vector<1x256xi32>
    %c0_i32_3 = arith.constant 0 : i32
    %9 = vector.broadcast %c0_i32_3 : i32 to vector<1x256xi32>
    %10 = arith.cmpi slt, %6, %9 : vector<1x256xi32>
    %c0_i32_4 = arith.constant 0 : i32
    %11 = arith.cmpi slt, %4, %c0_i32_4 : i32
    %12 = vector.broadcast %11 : i1 to vector<1x256xi1>
    %13 = vector.broadcast %12 : vector<1x256xi1> to vector<1x256xi1>
    %14 = arith.xori %10, %13 : vector<1x256xi1>
    %15 = arith.andi %14, %8 : vector<1x256xi1>
    %16 = vector.broadcast %4 : i32 to vector<1x256xi32>
    %17 = arith.addi %6, %16 : vector<1x256xi32>
    %18 = arith.select %15, %17, %6 : vector<1x256xi1>, vector<1x256xi32>
    %c1_i32_5 = arith.constant 1 : i32
    %19 = vector.broadcast %c1_i32_5 : i32 to vector<1x256xi32>
    %20 = arith.cmpi sge, %18, %19 : vector<1x256xi32>
    %c14_i32 = arith.constant 14 : i32
    %21 = vector.broadcast %c14_i32 : i32 to vector<1x256xi32>
    %22 = arith.cmpi sle, %18, %21 : vector<1x256xi32>
    %c0_6 = arith.constant 0 : index
    %c0_7 = arith.constant 0 : index
    %23 = vector.load %arg2[%c0_6, %c0_7] : memref<8x72xf32, #tpu.memory_space<vmem>>, vector<8x72xf32>
    %cst = arith.constant 0.000000e+00 : f32
    %24 = vector.broadcast %cst : f32 to vector<8x17xf32>
    %25 = tpu.concatenate %24, %1, %24 in 1 : vector<8x17xf32>, vector<8x256xf32>, vector<8x17xf32> -> vector<8x290xf32>
    %26 = vector.extract_strided_slice %25 {offsets = [0, 0], sizes = [8, 256], strides = [1, 1]} : vector<8x290xf32> to vector<8x256xf32>
    %cst_8 = arith.constant 0.000000e+00 : f32
    %27 = vector.shape_cast %20 : vector<1x256xi1> to vector<1x256xi1>
    %28 = vector.broadcast %27 : vector<1x256xi1> to vector<8x256xi1>
    %29 = vector.broadcast %cst_8 : f32 to vector<8x256xf32>
    %30 = arith.select %28, %26, %29 : vector<8x256xi1>, vector<8x256xf32>
    %31 = vector.extract_strided_slice %25 {offsets = [0, 1], sizes = [8, 256], strides = [1, 1]} : vector<8x290xf32> to vector<8x256xf32>
    %32 = vector.extract_strided_slice %25 {offsets = [0, 2], sizes = [8, 256], strides = [1, 1]} : vector<8x290xf32> to vector<8x256xf32>
    %cst_9 = arith.constant 0.000000e+00 : f32
    %33 = vector.shape_cast %22 : vector<1x256xi1> to vector<1x256xi1>
    %34 = vector.broadcast %33 : vector<1x256xi1> to vector<8x256xi1>
    %35 = vector.broadcast %cst_9 : f32 to vector<8x256xf32>
    %36 = arith.select %34, %32, %35 : vector<8x256xi1>, vector<8x256xf32>
    %37 = vector.extract_strided_slice %25 {offsets = [0, 16], sizes = [8, 256], strides = [1, 1]} : vector<8x290xf32> to vector<8x256xf32>
    %cst_10 = arith.constant 0.000000e+00 : f32
    %38 = vector.shape_cast %20 : vector<1x256xi1> to vector<1x256xi1>
    %39 = vector.broadcast %38 : vector<1x256xi1> to vector<8x256xi1>
    %40 = vector.broadcast %cst_10 : f32 to vector<8x256xf32>
    %41 = arith.select %39, %37, %40 : vector<8x256xi1>, vector<8x256xf32>
    %42 = vector.extract_strided_slice %25 {offsets = [0, 17], sizes = [8, 256], strides = [1, 1]} : vector<8x290xf32> to vector<8x256xf32>
    %43 = vector.extract_strided_slice %25 {offsets = [0, 18], sizes = [8, 256], strides = [1, 1]} : vector<8x290xf32> to vector<8x256xf32>
    %cst_11 = arith.constant 0.000000e+00 : f32
    %44 = vector.shape_cast %22 : vector<1x256xi1> to vector<1x256xi1>
    %45 = vector.broadcast %44 : vector<1x256xi1> to vector<8x256xi1>
    %46 = vector.broadcast %cst_11 : f32 to vector<8x256xf32>
    %47 = arith.select %45, %43, %46 : vector<8x256xi1>, vector<8x256xf32>
    %48 = vector.extract_strided_slice %25 {offsets = [0, 32], sizes = [8, 256], strides = [1, 1]} : vector<8x290xf32> to vector<8x256xf32>
    %cst_12 = arith.constant 0.000000e+00 : f32
    %49 = vector.shape_cast %20 : vector<1x256xi1> to vector<1x256xi1>
    %50 = vector.broadcast %49 : vector<1x256xi1> to vector<8x256xi1>
    %51 = vector.broadcast %cst_12 : f32 to vector<8x256xf32>
    %52 = arith.select %50, %48, %51 : vector<8x256xi1>, vector<8x256xf32>
    %53 = vector.extract_strided_slice %25 {offsets = [0, 33], sizes = [8, 256], strides = [1, 1]} : vector<8x290xf32> to vector<8x256xf32>
    %54 = vector.extract_strided_slice %25 {offsets = [0, 34], sizes = [8, 256], strides = [1, 1]} : vector<8x290xf32> to vector<8x256xf32>
    %cst_13 = arith.constant 0.000000e+00 : f32
    %55 = vector.shape_cast %22 : vector<1x256xi1> to vector<1x256xi1>
    %56 = vector.broadcast %55 : vector<1x256xi1> to vector<8x256xi1>
    %57 = vector.broadcast %cst_13 : f32 to vector<8x256xf32>
    %58 = arith.select %56, %54, %57 : vector<8x256xi1>, vector<8x256xf32>
    %59 = tpu.concatenate %30, %31, %36, %41, %42, %47, %52, %53, %58 in 0 : vector<8x256xf32>, vector<8x256xf32>, vector<8x256xf32>, vector<8x256xf32>, vector<8x256xf32>, vector<8x256xf32>, vector<8x256xf32>, vector<8x256xf32>, vector<8x256xf32> -> vector<72x256xf32>
    %cst_14 = arith.constant dense<0.000000e+00> : vector<8x256xf32>
    %60 = tpu.matmul %23, %59, %cst_14 {dimension_numbers = #tpu.dot_dimension_numbers<[1], [0], [0], [1], [0, 0, 1, 1], [], []>} : vector<8x72xf32>, vector<72x256xf32>, vector<8x256xf32> -> vector<8x256xf32>
    %c0_15 = arith.constant 0 : index
    %c0_16 = arith.constant 0 : index
    %61 = vector.load %arg4[%c0_15, %c0_16] : memref<8x1xf32, #tpu.memory_space<vmem>>, vector<8x1xf32>
    %62 = vector.broadcast %61 : vector<8x1xf32> to vector<8x256xf32>
    %63 = arith.mulf %60, %62 : vector<8x256xf32>
    %c0_17 = arith.constant 0 : index
    %c0_18 = arith.constant 0 : index
    %64 = vector.load %arg5[%c0_17, %c0_18] : memref<8x1xf32, #tpu.memory_space<vmem>>, vector<8x1xf32>
    %65 = vector.broadcast %64 : vector<8x1xf32> to vector<8x256xf32>
    %66 = arith.addf %63, %65 : vector<8x256xf32>
    %cst_19 = arith.constant 0.000000e+00 : f32
    %67 = vector.broadcast %cst_19 : f32 to vector<8x256xf32>
    %68 = arith.maximumf %66, %67 : vector<8x256xf32>
    %c0_20 = arith.constant 0 : index
    %c0_21 = arith.constant 0 : index
    %69 = vector.load %arg3[%c0_20, %c0_21] : memref<8x72xf32, #tpu.memory_space<vmem>>, vector<8x72xf32>
    %cst_22 = arith.constant 0.000000e+00 : f32
    %70 = vector.broadcast %cst_22 : f32 to vector<8x17xf32>
    %71 = tpu.concatenate %70, %68, %70 in 1 : vector<8x17xf32>, vector<8x256xf32>, vector<8x17xf32> -> vector<8x290xf32>
    %72 = vector.extract_strided_slice %71 {offsets = [0, 0], sizes = [8, 256], strides = [1, 1]} : vector<8x290xf32> to vector<8x256xf32>
    %cst_23 = arith.constant 0.000000e+00 : f32
    %73 = vector.shape_cast %20 : vector<1x256xi1> to vector<1x256xi1>
    %74 = vector.broadcast %73 : vector<1x256xi1> to vector<8x256xi1>
    %75 = vector.broadcast %cst_23 : f32 to vector<8x256xf32>
    %76 = arith.select %74, %72, %75 : vector<8x256xi1>, vector<8x256xf32>
    %77 = vector.extract_strided_slice %71 {offsets = [0, 1], sizes = [8, 256], strides = [1, 1]} : vector<8x290xf32> to vector<8x256xf32>
    %78 = vector.extract_strided_slice %71 {offsets = [0, 2], sizes = [8, 256], strides = [1, 1]} : vector<8x290xf32> to vector<8x256xf32>
    %cst_24 = arith.constant 0.000000e+00 : f32
    %79 = vector.shape_cast %22 : vector<1x256xi1> to vector<1x256xi1>
    %80 = vector.broadcast %79 : vector<1x256xi1> to vector<8x256xi1>
    %81 = vector.broadcast %cst_24 : f32 to vector<8x256xf32>
    %82 = arith.select %80, %78, %81 : vector<8x256xi1>, vector<8x256xf32>
    %83 = vector.extract_strided_slice %71 {offsets = [0, 16], sizes = [8, 256], strides = [1, 1]} : vector<8x290xf32> to vector<8x256xf32>
    %cst_25 = arith.constant 0.000000e+00 : f32
    %84 = vector.shape_cast %20 : vector<1x256xi1> to vector<1x256xi1>
    %85 = vector.broadcast %84 : vector<1x256xi1> to vector<8x256xi1>
    %86 = vector.broadcast %cst_25 : f32 to vector<8x256xf32>
    %87 = arith.select %85, %83, %86 : vector<8x256xi1>, vector<8x256xf32>
    %88 = vector.extract_strided_slice %71 {offsets = [0, 17], sizes = [8, 256], strides = [1, 1]} : vector<8x290xf32> to vector<8x256xf32>
    %89 = vector.extract_strided_slice %71 {offsets = [0, 18], sizes = [8, 256], strides = [1, 1]} : vector<8x290xf32> to vector<8x256xf32>
    %cst_26 = arith.constant 0.000000e+00 : f32
    %90 = vector.shape_cast %22 : vector<1x256xi1> to vector<1x256xi1>
    %91 = vector.broadcast %90 : vector<1x256xi1> to vector<8x256xi1>
    %92 = vector.broadcast %cst_26 : f32 to vector<8x256xf32>
    %93 = arith.select %91, %89, %92 : vector<8x256xi1>, vector<8x256xf32>
    %94 = vector.extract_strided_slice %71 {offsets = [0, 32], sizes = [8, 256], strides = [1, 1]} : vector<8x290xf32> to vector<8x256xf32>
    %cst_27 = arith.constant 0.000000e+00 : f32
    %95 = vector.shape_cast %20 : vector<1x256xi1> to vector<1x256xi1>
    %96 = vector.broadcast %95 : vector<1x256xi1> to vector<8x256xi1>
    %97 = vector.broadcast %cst_27 : f32 to vector<8x256xf32>
    %98 = arith.select %96, %94, %97 : vector<8x256xi1>, vector<8x256xf32>
    %99 = vector.extract_strided_slice %71 {offsets = [0, 33], sizes = [8, 256], strides = [1, 1]} : vector<8x290xf32> to vector<8x256xf32>
    %100 = vector.extract_strided_slice %71 {offsets = [0, 34], sizes = [8, 256], strides = [1, 1]} : vector<8x290xf32> to vector<8x256xf32>
    %cst_28 = arith.constant 0.000000e+00 : f32
    %101 = vector.shape_cast %22 : vector<1x256xi1> to vector<1x256xi1>
    %102 = vector.broadcast %101 : vector<1x256xi1> to vector<8x256xi1>
    %103 = vector.broadcast %cst_28 : f32 to vector<8x256xf32>
    %104 = arith.select %102, %100, %103 : vector<8x256xi1>, vector<8x256xf32>
    %105 = tpu.concatenate %76, %77, %82, %87, %88, %93, %98, %99, %104 in 0 : vector<8x256xf32>, vector<8x256xf32>, vector<8x256xf32>, vector<8x256xf32>, vector<8x256xf32>, vector<8x256xf32>, vector<8x256xf32>, vector<8x256xf32>, vector<8x256xf32> -> vector<72x256xf32>
    %cst_29 = arith.constant dense<0.000000e+00> : vector<8x256xf32>
    %106 = tpu.matmul %69, %105, %cst_29 {dimension_numbers = #tpu.dot_dimension_numbers<[1], [0], [0], [1], [0, 0, 1, 1], [], []>} : vector<8x72xf32>, vector<72x256xf32>, vector<8x256xf32> -> vector<8x256xf32>
    %c0_30 = arith.constant 0 : index
    %c0_31 = arith.constant 0 : index
    %107 = vector.load %arg6[%c0_30, %c0_31] : memref<8x1xf32, #tpu.memory_space<vmem>>, vector<8x1xf32>
    %108 = vector.broadcast %107 : vector<8x1xf32> to vector<8x256xf32>
    %109 = arith.mulf %106, %108 : vector<8x256xf32>
    %c0_32 = arith.constant 0 : index
    %c0_33 = arith.constant 0 : index
    %110 = vector.load %arg7[%c0_32, %c0_33] : memref<8x1xf32, #tpu.memory_space<vmem>>, vector<8x1xf32>
    %111 = vector.broadcast %110 : vector<8x1xf32> to vector<8x256xf32>
    %112 = arith.addf %109, %111 : vector<8x256xf32>
    %113 = arith.addf %112, %1 : vector<8x256xf32>
    %c0_34 = arith.constant 0 : index
    %c0_35 = arith.constant 0 : index
    %c0_36 = arith.constant 0 : index
    %114 = vector.load %arg8[%c0_34, %c0_35, %c0_36] : memref<1x8x256xf32, #tpu.memory_space<vmem>>, vector<1x8x256xf32>
    %115 = vector.shape_cast %114 : vector<1x8x256xf32> to vector<8x256xf32>
    %116 = vector.shape_cast %113 : vector<8x256xf32> to vector<1x8x256xf32>
    tpu.vector_store %arg8[%c0_34, %c0_35, %c0_36], %116 {strides = array<i32>} : memref<1x8x256xf32, #tpu.memory_space<vmem>>, vector<1x8x256xf32>,
    %cst_37 = arith.constant 0.000000e+00 : f32
    %117 = vector.broadcast %cst_37 : f32 to vector<8x256xf32>
    %118 = arith.maximumf %113, %117 : vector<8x256xf32>
    %c0_38 = arith.constant 0 : index
    %c0_39 = arith.constant 0 : index
    %c0_40 = arith.constant 0 : index
    %119 = vector.load %arg9[%c0_38, %c0_39, %c0_40] : memref<1x8x256xf32, #tpu.memory_space<vmem>>, vector<1x8x256xf32>
    %120 = vector.shape_cast %119 : vector<1x8x256xf32> to vector<8x256xf32>
    %121 = vector.shape_cast %118 : vector<8x256xf32> to vector<1x8x256xf32>
    tpu.vector_store %arg9[%c0_38, %c0_39, %c0_40], %121 {strides = array<i32>} : memref<1x8x256xf32, #tpu.memory_space<vmem>>, vector<1x8x256xf32>,
    return
  }
  func.func @transform_0(%arg0: i32) -> (i32, i32, i32) {
    %c0_i32 = arith.constant 0 : i32
    %c0_i32_0 = arith.constant 0 : i32
    %c0_i32_1 = arith.constant 0 : i32
    return %arg0, %c0_i32, %c0_i32_0 : i32, i32, i32
  }
  func.func @transform_1(%arg0: i32) -> (i32, i32) {
    %c0_i32 = arith.constant 0 : i32
    %c0_i32_0 = arith.constant 0 : i32
    %c0_i32_1 = arith.constant 0 : i32
    return %c0_i32, %c0_i32_0 : i32, i32
  }
  func.func @transform_2(%arg0: i32) -> (i32, i32) {
    %c0_i32 = arith.constant 0 : i32
    %c0_i32_0 = arith.constant 0 : i32
    %c0_i32_1 = arith.constant 0 : i32
    return %c0_i32, %c0_i32_0 : i32, i32
  }
  func.func @transform_3(%arg0: i32) -> (i32, i32) {
    %c0_i32 = arith.constant 0 : i32
    %c0_i32_0 = arith.constant 0 : i32
    %c0_i32_1 = arith.constant 0 : i32
    return %c0_i32, %c0_i32_0 : i32, i32
  }
  func.func @transform_4(%arg0: i32) -> (i32, i32) {
    %c0_i32 = arith.constant 0 : i32
    %c0_i32_0 = arith.constant 0 : i32
    %c0_i32_1 = arith.constant 0 : i32
    return %c0_i32, %c0_i32_0 : i32, i32
  }
  func.func @transform_5(%arg0: i32) -> (i32, i32) {
    %c0_i32 = arith.constant 0 : i32
    %c0_i32_0 = arith.constant 0 : i32
    %c0_i32_1 = arith.constant 0 : i32
    return %c0_i32, %c0_i32_0 : i32, i32
  }
  func.func @transform_6(%arg0: i32) -> (i32, i32) {
    %c0_i32 = arith.constant 0 : i32
    %c0_i32_0 = arith.constant 0 : i32
    %c0_i32_1 = arith.constant 0 : i32
    return %c0_i32, %c0_i32_0 : i32, i32
  }
  func.func @transform_7(%arg0: i32) -> (i32, i32, i32) {
    %c0_i32 = arith.constant 0 : i32
    %c0_i32_0 = arith.constant 0 : i32
    %c0_i32_1 = arith.constant 0 : i32
    return %arg0, %c0_i32, %c0_i32_0 : i32, i32, i32
  }
  func.func @transform_8(%arg0: i32) -> (i32, i32, i32) {
    %c0_i32 = arith.constant 0 : i32
    %c0_i32_0 = arith.constant 0 : i32
    %c0_i32_1 = arith.constant 0 : i32
    return %arg0, %c0_i32, %c0_i32_0 : i32, i32, i32
  }
}

</mosaic_0001>

<llo_original>
// kernel: tpu_custom_call.1
$region0: #{tpu_custom_call.1}
  #allocation0 [shape = 'u32[]', space=smem, size = 0x4, offset = 0x4, fixed_abs, tag = 'smem constant byte address 0x4 - core index']
  #allocation1 [shape = 'u32[144,128]{1,0:T(1,128)}', space=vmem, size = 0x12000, scoped, tag = 'internal scratch']
  %s0 = inlined_call_operand.vmem [shape: f32[2,8,256], index: 0, kind: input, shape index: {}]
  %s1 = inlined_call_operand.hbm [shape: f32[8,72], index: 1, kind: input, shape index: {}]
  %s2 = inlined_call_operand.vmem [shape: f32[8,72], index: 2, kind: input, shape index: {}]
  %s3 = inlined_call_operand.vmem [shape: f32[8,1], index: 3, kind: input, shape index: {}]
  %s4 = inlined_call_operand.vmem [shape: f32[8,1], index: 4, kind: input, shape index: {}]
  %s5 = inlined_call_operand.vmem [shape: f32[8,1], index: 5, kind: input, shape index: {}]
  %s6 = inlined_call_operand.vmem [shape: f32[8,1], index: 6, kind: input, shape index: {}]
  %s7 = inlined_call_operand.hbm [shape: f32[2,8,256], index: 7, kind: output, shape index: {0}]
  %s8 = inlined_call_operand.hbm [shape: f32[2,8,256], index: 8, kind: output, shape index: {1}]
  %9 = xla_tuple %s7, %s8
  %s10 = sld [smem:[#allocation0]]
  $region73: #{tpu_custom_call.1} parent=0
    _
  %s12 = ssub.s32 1, %s10
  %s13 = scalar_select 0, %s12, %s10
  $region1: #{tpu_custom_call.1} parent=0
    #allocation2 [shape = 'u8[4096]{0}', space=vmem, size = 0x1000, scoped, tag = 'input window, operand 1, single buffered']
    #allocation3 [shape = 's32[2]{0}', space=sflag, size = 0x8, scoped, tag = 'scoped memory for tpu_custom_call.1']
    #allocation4 [shape = 's32[2]{0}', space=sflag, size = 0x8, scoped, tag = 'scoped memory for tpu_custom_call.1']
    #allocation5 [shape = 'u8[16384]{0}', space=vmem, size = 0x4000, scoped, tag = 'output window, operand 0']
    #allocation6 [shape = 'u8[16384]{0}', space=vmem, size = 0x4000, scoped, tag = 'output window, operand 1']
    #allocation7 [shape = 's32[2]{0}', space=sflag, size = 0x8, scoped, tag = 'scoped memory for tpu_custom_call.1']
    %14 = vsyncpa [#allocation3], 0
    %15 = vsyncpa [#allocation4], 0
    %s16 = scalar_lea.sflag [#allocation4], 1
    %17 = vsyncpa %s16, 0
    %18 = vsyncpa [#allocation7], 0
    %s19 = scalar_lea.sflag [#allocation7], 1
    %20 = vsyncpa %s19, 0
    loop: start=0, step=1, limit=4
    $region2: #{tpu_custom_call.1} parent=1 // loop_pre_header
      _
    $region3: #{tpu_custom_call.1} parent=1 // loop_header
      %s22 = sphi 0, %s26
      %p23 = scmp.ge.s32.totalorder %s22, 4
      %s32 = sphi 0, %s34
      %s35 = sphi 0, %s32
      %s36 = sphi 0, %s35
      %s52 = sphi 0, %s36
      %s56 = sphi 0, %s56
      %s58 = sphi 0, %s56
      %s59 = sphi 0, %s58
      %s73 = sphi 0, %s59
      %s77 = sphi 0, %s77
      %s79 = sphi 0, %s77
      %s80 = sphi 0, %s79
      %s94 = sphi 0, %s80
      %s98 = sphi 0, %s98
      %s100 = sphi 0, %s98
      %s101 = sphi 0, %s100
      %s115 = sphi 0, %s101
      %s119 = sphi 0, %s119
      %s121 = sphi 0, %s119
      %s122 = sphi 0, %s121
      %s136 = sphi 0, %s122
      %s140 = sphi 0, %s140
      %s142 = sphi 0, %s140
      %s143 = sphi 0, %s142
      %s157 = sphi 0, %s143
      %s161 = sphi 0, %s161
      %s163 = sphi 0, %s161
      %s164 = sphi 0, %s163
      %s178 = sphi 0, %s164
      %s184 = sphi 0, %s186
      %s187 = sphi 0, %s184
      %s188 = sphi 0, %s187
      %s204 = sphi 0, %s188
      %s210 = sphi 0, %s212
      %s213 = sphi 0, %s210
      %s214 = sphi 0, %s213
      %s230 = sphi 0, %s214
    $region4: #{tpu_custom_call.1} parent=1 // loop_header_branch
      %25 = sbr.rel (%p23) target = $region8
    $region5: #{tpu_custom_call.1} parent=1 // loop_body
      %s27 = ssub.s32 %s22, 1
      %s28 = ssub.s32 %s22, 2
      %s29 = sadd.s32 %s22, 1
      %s30 = ssub.s32 %s22, %s29
      %p31 = scmp.eq.s32.totalorder %s30, 0
      %s33 = sadd.s32 %s32, 1
      %s34 = scalar_select %p31, %s32, %s33
      %p37 = pneg %p31
      %p38 = scmp.eq.s32.totalorder %s22, 1
      %p39 = por %p37, %p38
      %p40 = scmp.ne.s32.totalorder %s32, %s35
      %p41 = scmp.eq.s32.totalorder %s22, 0
      %p42 = por %p40, %p41
      %p43 = scmp.ne.s32.totalorder %s32, %s35
      %p44 = scmp.eq.s32.totalorder %s27, 1
      %p45 = por %p43, %p44
      %p46 = scmp.ne.s32.totalorder %s35, %s36
      %p47 = scmp.eq.s32.totalorder %s27, 0
      %p48 = por %p46, %p47
      %p49 = scmp.ne.s32.totalorder %s35, %s36
      %p50 = scmp.eq.s32.totalorder %s28, 1
      %p51 = por %p49, %p50
      %p53 = scmp.ne.s32.totalorder %s36, %s52
      %p54 = scmp.eq.s32.totalorder %s28, 0
      %p55 = por %p53, %p54
      %s57 = sadd.s32 %s56, 1
      %p60 = scmp.eq.s32.totalorder %s22, 1
      %p61 = scmp.ne.s32.totalorder %s56, %s58
      %p62 = scmp.eq.s32.totalorder %s22, 0
      %p63 = por %p61, %p62
      %p64 = scmp.ne.s32.totalorder %s56, %s58
      %p65 = scmp.eq.s32.totalorder %s27, 1
      %p66 = por %p64, %p65
      %p67 = scmp.ne.s32.totalorder %s58, %s59
      %p68 = scmp.eq.s32.totalorder %s27, 0
      %p69 = por %p67, %p68
      %p70 = scmp.ne.s32.totalorder %s58, %s59
      %p71 = scmp.eq.s32.totalorder %s28, 1
      %p72 = por %p70, %p71
      %p74 = scmp.ne.s32.totalorder %s59, %s73
      %p75 = scmp.eq.s32.totalorder %s28, 0
      %p76 = por %p74, %p75
      %s78 = sadd.s32 %s77, 1
      %p81 = scmp.eq.s32.totalorder %s22, 1
      %p82 = scmp.ne.s32.totalorder %s77, %s79
      %p83 = scmp.eq.s32.totalorder %s22, 0
      %p84 = por %p82, %p83
      %p85 = scmp.ne.s32.totalorder %s77, %s79
      %p86 = scmp.eq.s32.totalorder %s27, 1
      %p87 = por %p85, %p86
      %p88 = scmp.ne.s32.totalorder %s79, %s80
      %p89 = scmp.eq.s32.totalorder %s27, 0
      %p90 = por %p88, %p89
      %p91 = scmp.ne.s32.totalorder %s79, %s80
      %p92 = scmp.eq.s32.totalorder %s28, 1
      %p93 = por %p91, %p92
      %p95 = scmp.ne.s32.totalorder %s80, %s94
      %p96 = scmp.eq.s32.totalorder %s28, 0
      %p97 = por %p95, %p96
      %s99 = sadd.s32 %s98, 1
      %p102 = scmp.eq.s32.totalorder %s22, 1
      %p103 = scmp.ne.s32.totalorder %s98, %s100
      %p104 = scmp.eq.s32.totalorder %s22, 0
      %p105 = por %p103, %p104
      %p106 = scmp.ne.s32.totalorder %s98, %s100
      %p107 = scmp.eq.s32.totalorder %s27, 1
      %p108 = por %p106, %p107
      %p109 = scmp.ne.s32.totalorder %s100, %s101
      %p110 = scmp.eq.s32.totalorder %s27, 0
      %p111 = por %p109, %p110
      %p112 = scmp.ne.s32.totalorder %s100, %s101
      %p113 = scmp.eq.s32.totalorder %s28, 1
      %p114 = por %p112, %p113
      %p116 = scmp.ne.s32.totalorder %s101, %s115
      %p117 = scmp.eq.s32.totalorder %s28, 0
      %p118 = por %p116, %p117
      %s120 = sadd.s32 %s119, 1
      %p123 = scmp.eq.s32.totalorder %s22, 1
      %p124 = scmp.ne.s32.totalorder %s119, %s121
      %p125 = scmp.eq.s32.totalorder %s22, 0
      %p126 = por %p124, %p125
      %p127 = scmp.ne.s32.totalorder %s119, %s121
      %p128 = scmp.eq.s32.totalorder %s27, 1
      %p129 = por %p127, %p128
      %p130 = scmp.ne.s32.totalorder %s121, %s122
      %p131 = scmp.eq.s32.totalorder %s27, 0
      %p132 = por %p130, %p131
      %p133 = scmp.ne.s32.totalorder %s121, %s122
      %p134 = scmp.eq.s32.totalorder %s28, 1
      %p135 = por %p133, %p134
      %p137 = scmp.ne.s32.totalorder %s122, %s136
      %p138 = scmp.eq.s32.totalorder %s28, 0
      %p139 = por %p137, %p138
      %s141 = sadd.s32 %s140, 1
      %p144 = scmp.eq.s32.totalorder %s22, 1
      %p145 = scmp.ne.s32.totalorder %s140, %s142
      %p146 = scmp.eq.s32.totalorder %s22, 0
      %p147 = por %p145, %p146
      %p148 = scmp.ne.s32.totalorder %s140, %s142
      %p149 = scmp.eq.s32.totalorder %s27, 1
      %p150 = por %p148, %p149
      %p151 = scmp.ne.s32.totalorder %s142, %s143
      %p152 = scmp.eq.s32.totalorder %s27, 0
      %p153 = por %p151, %p152
      %p154 = scmp.ne.s32.totalorder %s142, %s143
      %p155 = scmp.eq.s32.totalorder %s28, 1
      %p156 = por %p154, %p155
      %p158 = scmp.ne.s32.totalorder %s143, %s157
      %p159 = scmp.eq.s32.totalorder %s28, 0
      %p160 = por %p158, %p159
      %s162 = sadd.s32 %s161, 1
      %p165 = scmp.eq.s32.totalorder %s22, 1
      %p166 = scmp.ne.s32.totalorder %s161, %s163
      %p167 = scmp.eq.s32.totalorder %s22, 0
      %p168 = por %p166, %p167
      %p169 = scmp.ne.s32.totalorder %s161, %s163
      %p170 = scmp.eq.s32.totalorder %s27, 1
      %p171 = por %p169, %p170
      %p172 = scmp.ne.s32.totalorder %s163, %s164
      %p173 = scmp.eq.s32.totalorder %s27, 0
      %p174 = por %p172, %p173
      %p175 = scmp.ne.s32.totalorder %s163, %s164
      %p176 = scmp.eq.s32.totalorder %s28, 1
      %p177 = por %p175, %p176
      %p179 = scmp.ne.s32.totalorder %s164, %s178
      %p180 = scmp.eq.s32.totalorder %s28, 0
      %p181 = por %p179, %p180
      %s182 = ssub.s32 %s22, %s29
      %p183 = scmp.eq.s32.totalorder %s182, 0
      %s185 = sadd.s32 %s184, 1
      %s186 = scalar_select %p183, %s184, %s185
      %p189 = pneg %p183
      %p190 = scmp.eq.s32.totalorder %s22, 1
      %p191 = por %p189, %p190
      %p192 = scmp.ne.s32.totalorder %s184, %s187
      %p193 = scmp.eq.s32.totalorder %s22, 0
      %p194 = por %p192, %p193
      %p195 = scmp.ne.s32.totalorder %s184, %s187
      %p196 = scmp.eq.s32.totalorder %s27, 1
      %p197 = por %p195, %p196
      %p198 = scmp.ne.s32.totalorder %s187, %s188
      %p199 = scmp.eq.s32.totalorder %s27, 0
      %p200 = por %p198, %p199
      %p201 = scmp.ne.s32.totalorder %s187, %s188
      %p202 = scmp.eq.s32.totalorder %s28, 1
      %p203 = por %p201, %p202
      %p205 = scmp.ne.s32.totalorder %s188, %s204
      %p206 = scmp.eq.s32.totalorder %s28, 0
      %p207 = por %p205, %p206
      %s208 = ssub.s32 %s22, %s29
      %p209 = scmp.eq.s32.totalorder %s208, 0
      %s211 = sadd.s32 %s210, 1
      %s212 = scalar_select %p209, %s210, %s211
      %p215 = pneg %p209
      %p216 = scmp.eq.s32.totalorder %s22, 1
      %p217 = por %p215, %p216
      %p218 = scmp.ne.s32.totalorder %s210, %s213
      %p219 = scmp.eq.s32.totalorder %s22, 0
      %p220 = por %p218, %p219
      %p221 = scmp.ne.s32.totalorder %s210, %s213
      %p222 = scmp.eq.s32.totalorder %s27, 1
      %p223 = por %p221, %p222
      %p224 = scmp.ne.s32.totalorder %s213, %s214
      %p225 = scmp.eq.s32.totalorder %s27, 0
      %p226 = por %p224, %p225
      %p227 = scmp.ne.s32.totalorder %s213, %s214
      %p228 = scmp.eq.s32.totalorder %s28, 1
      %p229 = por %p227, %p228
      %p231 = scmp.ne.s32.totalorder %s214, %s230
      %p232 = scmp.eq.s32.totalorder %s28, 0
      %p233 = por %p231, %p232
      %p234 = scmp.le.s32.totalorder 1, %s22
      %p235 = scmp.lt.s32.totalorder %s22, 3
      %p236 = pnand %p234, %p235
      %p237 = pneg %p236
      // Predicated region
      $region9: #{tpu_custom_call.1} parent=5 // pred_check
        _
      $region10: #{tpu_custom_call.1} parent=5 // pred_check_branch
        %239 = sbr.rel (%p236) target = $region12
      $region11: #{tpu_custom_call.1} parent=5 // pred_region
        %s240 = ssub.s32 %s22, 1
        // Predicated region
        $region13: #{tpu_custom_call.1} parent=11 // pred_check
          %p241 = pneg %p69
        $region14: #{tpu_custom_call.1} parent=11 // pred_check_branch
          %243 = sbr.rel (%p241) target = $region16
        $region15: #{tpu_custom_call.1} parent=11 // pred_region
          %s245 = ssub.s32 128, 128
          %246 = vsyncadd [#allocation3], %s245
          %s248 = sshll.u32 [#allocation2], 4
          %s249 = int_to_ptr.vmem [resolvable:$true] %s248
          %251 = dma.hbm_to_vmem [thread:$0]  %s1, 128, %s249, [#allocation3]
        $region16: #{tpu_custom_call.1} parent=11 // pred_fallthru
          _
        // Predicated region
        $region17: #{tpu_custom_call.1} parent=11 // pred_check
          %p252 = pneg %p90
        $region18: #{tpu_custom_call.1} parent=11 // pred_check_branch
          %254 = sbr.rel (%p252) target = $region20
        $region19: #{tpu_custom_call.1} parent=11 // pred_region
          _
        $region20: #{tpu_custom_call.1} parent=11 // pred_fallthru
          _
        // Predicated region
        $region21: #{tpu_custom_call.1} parent=11 // pred_check
          %p255 = pneg %p111
        $region22: #{tpu_custom_call.1} parent=11 // pred_check_branch
          %257 = sbr.rel (%p255) target = $region24
        $region23: #{tpu_custom_call.1} parent=11 // pred_region
          _
        $region24: #{tpu_custom_call.1} parent=11 // pred_fallthru
          _
        // Predicated region
        $region25: #{tpu_custom_call.1} parent=11 // pred_check
          %p258 = pneg %p132
        $region26: #{tpu_custom_call.1} parent=11 // pred_check_branch
          %260 = sbr.rel (%p258) target = $region28
        $region27: #{tpu_custom_call.1} parent=11 // pred_region
          _
        $region28: #{tpu_custom_call.1} parent=11 // pred_fallthru
          _
        // Predicated region
        $region29: #{tpu_custom_call.1} parent=11 // pred_check
          %p261 = pneg %p153
        $region30: #{tpu_custom_call.1} parent=11 // pred_check_branch
          %263 = sbr.rel (%p261) target = $region32
        $region31: #{tpu_custom_call.1} parent=11 // pred_region
          _
        $region32: #{tpu_custom_call.1} parent=11 // pred_fallthru
          _
        // Predicated region
        $region33: #{tpu_custom_call.1} parent=11 // pred_check
          %p264 = pneg %p174
        $region34: #{tpu_custom_call.1} parent=11 // pred_check_branch
          %266 = sbr.rel (%p264) target = $region36
        $region35: #{tpu_custom_call.1} parent=11 // pred_region
          _
        $region36: #{tpu_custom_call.1} parent=11 // pred_fallthru
          _
      $region12: #{tpu_custom_call.1} parent=5 // pred_fallthru
        _
      %p267 = scmp.lt.s32.totalorder %s22, 2
      // Predicated region
      $region37: #{tpu_custom_call.1} parent=5 // pred_check
        %p268 = pneg %p267
      $region38: #{tpu_custom_call.1} parent=5 // pred_check_branch
        %270 = sbr.rel (%p268) target = $region40
      $region39: #{tpu_custom_call.1} parent=5 // pred_region
        // Predicated region
        $region41: #{tpu_custom_call.1} parent=39 // pred_check
          %p271 = pneg %p42
        $region42: #{tpu_custom_call.1} parent=39 // pred_check_branch
          %273 = sbr.rel (%p271) target = $region44
        $region43: #{tpu_custom_call.1} parent=39 // pred_region
          %p274 = scmp.lt.s32.totalorder %s22, 1
          %s275 = scalar_select %p274, %s22, 1
          %s276 = smul.addr %s275, 2
          %s277 = smul.addr %s276, 8
          %s278 = scalar_lea.vmem %s0, %s277
        $region44: #{tpu_custom_call.1} parent=39 // pred_fallthru
          _
      $region40: #{tpu_custom_call.1} parent=5 // pred_fallthru
        _
      %p279 = scmp.le.s32.totalorder 1, %s22
      %p280 = scmp.lt.s32.totalorder %s22, 3
      %p281 = pnand %p279, %p280
      %p282 = pneg %p281
      // Predicated region
      $region45: #{tpu_custom_call.1} parent=5 // pred_check
        _
      $region46: #{tpu_custom_call.1} parent=5 // pred_check_branch
        %284 = sbr.rel (%p281) target = $region48
      $region47: #{tpu_custom_call.1} parent=5 // pred_region
        %s285 = ssub.s32 %s22, 1
        // Predicated region
        $region49: #{tpu_custom_call.1} parent=47 // pred_check
          %p286 = pneg %p69
        $region50: #{tpu_custom_call.1} parent=47 // pred_check_branch
          %288 = sbr.rel (%p286) target = $region52
        $region51: #{tpu_custom_call.1} parent=47 // pred_region
          %289 = dma.done [#allocation3], 128
        $region52: #{tpu_custom_call.1} parent=47 // pred_fallthru
          _
        %p290 = scmp.lt.s32.totalorder %s27, 1
        %s291 = scalar_select %p290, %s27, 1
        %s292 = smul.addr %s291, 2
        %s293 = smul.addr %s292, 8
        %s294 = scalar_lea.vmem %s0, %s293
        %p295 = pneg %p48
        %p296 = pneg %p45
        %p297 = pneg %p69
        %p298 = pneg %p66
        %p299 = pneg %p90
        %p300 = pneg %p87
        %p301 = pneg %p111
        %p302 = pneg %p108
        %p303 = pneg %p132
        %p304 = pneg %p129
        %p305 = pneg %p153
        %p306 = pneg %p150
        %p307 = pneg %p174
        %p308 = pneg %p171
        %p309 = pneg %p200
        %p310 = pneg %p197
        %s311 = sand.u32 %s187, 1
        %s312 = scalar_lea.sflag [#allocation4], %s311
        %s313 = sand.u32 %s187, 1
        %s314 = smul.addr %s313, 16
        %s315 = scalar_lea.vmem [#allocation5], %s314
        %p316 = pneg %p226
        %p317 = pneg %p223
        %s318 = sand.u32 %s213, 1
        %s319 = scalar_lea.sflag [#allocation7], %s318
        %s320 = sand.u32 %s213, 1
        %s321 = smul.addr %s320, 16
        %s322 = scalar_lea.vmem [#allocation6], %s321
        %p323 = scmp.lt.s32.totalorder %s27, 1
        %s324 = scalar_select %p323, %s27, 1
        %s325 = smul.addr %s324, 2
        %s326 = smul.addr %s325, 8
        %s327 = scalar_lea.vmem %s0, %s326
        %v328 = vld [vmem:[%s327] sm:$0xff]
        %v329 = vld [vmem:[%s327 + $0x8] sm:$0xff]
        %v330 = vlaneseq
        %v331 = vand.u32 %v330, 127
        %v332 = vadd.s32 %v331, 128
        %vm333 = vcmp.lt.s32.totalorder %v331, 0
        %v334 = vsub.s32 0, %v331
        %v335 = vsel %vm333, %v334, %v331
        %v336 = vshrl.u32 %v335, 4
        %v337 = vand.u32 %v335, 15
        %v338 = vsub.s32 0, %v337
        %v339 = vsel %vm333, %v338, %v337
        %vm340 = vcmp.lt.s32.totalorder %v332, 0
        %v341 = vsub.s32 0, %v332
        %v342 = vsel %vm340, %v341, %v332
        %v343 = vshrl.u32 %v342, 4
        %v344 = vand.u32 %v342, 15
        %v345 = vsub.s32 0, %v344
        %v346 = vsel %vm340, %v345, %v344
        %vm347 = vcmp.ne.s32.totalorder %v339, 0
        %vm348 = vcmp.ne.s32.totalorder %v346, 0
        %vm349 = vcmp.lt.s32.totalorder %v339, 0
        %vm350 = vcmp.lt.s32.totalorder %v346, 0
        %vm351 = vmand %vm349, %vm347
        %vm352 = vmand %vm350, %vm348
        %v353 = vadd.s32 %v339, 16
        %v354 = vadd.s32 %v346, 16
        %v355 = vsel %vm351, %v353, %v339
        %v356 = vsel %vm352, %v354, %v346
        %vm357 = vcmp.ge.s32.totalorder %v355, 1
        %vm358 = vcmp.ge.s32.totalorder %v356, 1
        %vm359 = vcmp.le.s32.totalorder %v355, 14
        %vm360 = vcmp.le.s32.totalorder %v356, 14
        %v361 = vld [vmem:[#allocation2] sm:$0xff]
        %364 = vrot.lane.b32.xlu0 %v328, 17
        %v365 = vpop.permute.xlu0 %364
        %366 = vrot.lane.b32.xlu0 %v329, 17
        %v367 = vpop.permute.xlu0 %366
        %vm368 = vcmask 138240
        %v369 = vsel %vm368, %v365, %v367
        %v373 = vsel %vm368, 0.0, %v365
        %v374 = vsel %vm368, %v367, 0.0
        %v375 = vsel %vm357, 1, 0
        %v376 = vsel %vm358, 1, 0
        %vm377 = vcmp.eq.s32.totalorder %v375, 1
        %vm378 = vcmp.eq.s32.totalorder %v376, 1
        %v379 = vsel %vm377, %v373, 0.0
        %v380 = vsel %vm378, %v369, 0.0
        %v381 = vsel %vm359, 1, 0
        %v382 = vsel %vm360, 1, 0
        %vm383 = vcmp.eq.s32.totalorder %v381, 1
        %vm384 = vcmp.eq.s32.totalorder %v382, 1
        %387 = vrot.lane.b32.xlu0 %v373, 126
        %v388 = vpop.permute.xlu0 %387
        %389 = vrot.lane.b32.xlu0 %v369, 126
        %v390 = vpop.permute.xlu0 %389
        %391 = vrot.lane.b32.xlu0 %v374, 126
        %v392 = vpop.permute.xlu0 %391
        %vm393 = vcmask 1031168
        %v394 = vsel %vm393, %v388, %v390
        %v395 = vsel %vm393, %v390, %v392
        %v398 = vsel %vm383, %v394, 0.0
        %v399 = vsel %vm384, %v395, 0.0
        %400 = vrot.lane.b32.xlu0 %v373, 112
        %v401 = vpop.permute.xlu0 %400
        %402 = vrot.lane.b32.xlu0 %v369, 112
        %v403 = vpop.permute.xlu0 %402
        %404 = vrot.lane.b32.xlu0 %v374, 112
        %v405 = vpop.permute.xlu0 %404
        %vm406 = vcmask 916480
        %v407 = vsel %vm406, %v401, %v403
        %v408 = vsel %vm406, %v403, %v405
        %v411 = vsel %vm377, %v407, 0.0
        %v412 = vsel %vm378, %v408, 0.0
        %413 = vrot.lane.b32.xlu0 %v373, 110
        %v414 = vpop.permute.xlu0 %413
        %415 = vrot.lane.b32.xlu0 %v369, 110
        %v416 = vpop.permute.xlu0 %415
        %417 = vrot.lane.b32.xlu0 %v374, 110
        %v418 = vpop.permute.xlu0 %417
        %vm419 = vcmask 900096
        %v420 = vsel %vm419, %v414, %v416
        %v421 = vsel %vm419, %v416, %v418
        %v424 = vsel %vm383, %v420, 0.0
        %v425 = vsel %vm384, %v421, 0.0
        %426 = vrot.lane.b32.xlu0 %v373, 96
        %v427 = vpop.permute.xlu0 %426
        %428 = vrot.lane.b32.xlu0 %v369, 96
        %v429 = vpop.permute.xlu0 %428
        %430 = vrot.lane.b32.xlu0 %v374, 96
        %v431 = vpop.permute.xlu0 %430
        %vm432 = vcmask 785408
        %v433 = vsel %vm432, %v427, %v429
        %v434 = vsel %vm432, %v429, %v431
        %v437 = vsel %vm377, %v433, 0.0
        %v438 = vsel %vm378, %v434, 0.0
        %439 = vrot.lane.b32.xlu0 %v373, 94
        %v440 = vpop.permute.xlu0 %439
        %441 = vrot.lane.b32.xlu0 %v369, 94
        %v442 = vpop.permute.xlu0 %441
        %443 = vrot.lane.b32.xlu0 %v374, 94
        %v444 = vpop.permute.xlu0 %443
        %vm445 = vcmask 769024
        %v446 = vsel %vm445, %v440, %v442
        %v447 = vsel %vm445, %v442, %v444
        %v450 = vsel %vm383, %v446, 0.0
        %v451 = vsel %vm384, %v447, 0.0
        %452 = vrot.lane.b32.xlu0 %v373, 127
        %v453 = vpop.permute.xlu0 %452
        %454 = vrot.lane.b32.xlu0 %v369, 127
        %v455 = vpop.permute.xlu0 %454
        %456 = vrot.lane.b32.xlu0 %v374, 127
        %v457 = vpop.permute.xlu0 %456
        %vm458 = vcmask 1039360
        %v459 = vsel %vm458, %v453, %v455
        %v460 = vsel %vm458, %v455, %v457
        %463 = vrot.lane.b32.xlu0 %v373, 111
        %v464 = vpop.permute.xlu0 %463
        %465 = vrot.lane.b32.xlu0 %v369, 111
        %v466 = vpop.permute.xlu0 %465
        %467 = vrot.lane.b32.xlu0 %v374, 111
        %v468 = vpop.permute.xlu0 %467
        %vm469 = vcmask 908288
        %v470 = vsel %vm469, %v464, %v466
        %v471 = vsel %vm469, %v466, %v468
        %474 = vrot.lane.b32.xlu0 %v373, 95
        %v475 = vpop.permute.xlu0 %474
        %476 = vrot.lane.b32.xlu0 %v369, 95
        %v477 = vpop.permute.xlu0 %476
        %478 = vrot.lane.b32.xlu0 %v374, 95
        %v479 = vpop.permute.xlu0 %478
        %vm480 = vcmask 777216
        %v481 = vsel %vm480, %v475, %v477
        %v482 = vsel %vm480, %v477, %v479
        %vm485 = vcmask 588800
        %v487 = vsel %vm485, %v361, 0
        %489 = vmatprep.subr.mxu0 %v380
        %490 = vmatpush1.msra.mxu0 %v379
        %491 = vmatprep.subr.mxu0 %v460
        %492 = vmatpush1.msra.mxu0 %v459
        %493 = vmatprep.subr.mxu0 %v399
        %494 = vmatpush1.msra.mxu0 %v398
        %495 = vmatprep.subr.mxu0 %v412
        %496 = vmatpush1.msra.mxu0 %v411
        %497 = vmatprep.subr.mxu0 %v471
        %498 = vmatpush1.msra.mxu0 %v470
        %499 = vmatprep.subr.mxu0 %v425
        %500 = vmatpush1.msra.mxu0 %v424
        %501 = vmatprep.subr.mxu0 %v438
        %502 = vmatpush1.msra.mxu0 %v437
        %503 = vmatprep.subr.mxu0 %v482
        %504 = vmatpush1.msra.mxu0 %v481
        %505 = vmatprep.subr.mxu0 %v451
        %506 = vmatpush1.msra.mxu0 %v450
        %507 = vmatprep.subr.mxu0 0.0
        %508 = vmatpush1.msra.mxu0 0.0
        %509 = vmatprep.subr.mxu0 0.0
        %510 = vmatpush1.msra.mxu0 0.0
        %511 = vmatprep.subr.mxu0 0.0
        %512 = vmatpush1.msra.mxu0 0.0
        %513 = vmatprep.subr.mxu0 0.0
        %514 = vmatpush1.msra.mxu0 0.0
        %515 = vmatprep.subr.mxu0 0.0
        %516 = vmatpush1.msra.mxu0 0.0
        %517 = vmatprep.subr.mxu0 0.0
        %518 = vmatpush1.msra.mxu0 0.0
        %519 = vmatprep.subr.mxu0 0.0
        %520 = vmatpush1.msra.mxu0 0.0
        %521 = vmatprep.subr.mxu0 0.0
        %522 = vmatpush1.msra.mxu0 0.0
        %523 = vmatprep.subr.mxu0 0.0
        %524 = vmatpush1.msra.mxu0 0.0
        %525 = vmatprep.subr.mxu0 0.0
        %526 = vmatpush1.msra.mxu0 0.0
        %527 = vmatprep.subr.mxu0 0.0
        %528 = vmatpush1.msra.mxu0 0.0
        %529 = vmatprep.subr.mxu0 0.0
        %530 = vmatpush1.msra.mxu0 0.0
        %531 = vmatprep.subr.mxu0 0.0
        %532 = vmatpush1.msra.mxu0 0.0
        %533 = vmatprep.subr.mxu0 0.0
        %534 = vmatpush1.msra.mxu0 0.0
        %535 = vmatprep.subr.mxu0 0.0
        %536 = vmatpush1.msra.mxu0 0.0
        %537 = vmatprep.subr.mxu0 0.0
        %538 = vmatpush1.msra.mxu0 0.0
        %539 = vmatprep.subr.mxu0 0.0
        %540 = vmatpush1.msra.mxu0 0.0
        %541 = vmatprep.subr.mxu0 0.0
        %542 = vmatpush1.msra.mxu0 0.0
        %543 = vmatprep.subr.mxu0 0.0
        %544 = vmatpush1.msra.mxu0 0.0
        %545 = vmatprep.subr.mxu0 0.0
        %546 = vmatpush1.msra.mxu0 0.0
        %547 = vmatprep.subr.mxu0 0.0
        %548 = vmatpush1.msra.mxu0 0.0
        %549 = vmatprep.subr.mxu0 0.0
        %550 = vmatpush1.msra.mxu0 0.0
        %551 = vmatprep.subr.mxu0 0.0
        %552 = vmatpush1.msra.mxu0 0.0
        %553 = vmatprep.mubr.f32.mxu0 0.0
        %554 = vmatmul.mubr.f32.gmra.mrb[0].mxu0 %v487
        %v555 = vpop.f32.mrb[0].mxu0
        %v556 = vadd.f32 0.0, %v555
        %v557 = vpop.f32.mrb[0].mxu0
        %v558 = vadd.f32 0.0, %v557
        %559 = vdwg.mxu0
        %v560 = vld [vmem:[%s3] sm:$0xff]
        %562 = vset.pattern.permute.xlu0 0
        %563 = vperm.xlu0 %562, %v560
        %v564 = vpop.permute.xlu0 %563
        %v566 = vmul.f32 %v556, %v564
        %v567 = vmul.f32 %v558, %v564
        %v568 = vld [vmem:[%s4] sm:$0xff]
        %570 = vset.pattern.permute.xlu0 0
        %571 = vperm.xlu0 %570, %v568
        %v572 = vpop.permute.xlu0 %571
        %v574 = vadd.f32 %v566, %v572
        %v575 = vadd.f32 %v567, %v572
        %v576 = vmax.f32 %v574, 0.0
        %v577 = vmax.f32 %v575, 0.0
        %v578 = vld [vmem:[%s2] sm:$0xff]
        %581 = vrot.lane.b32.xlu0 %v576, 17
        %v582 = vpop.permute.xlu0 %581
        %583 = vrot.lane.b32.xlu0 %v577, 17
        %v584 = vpop.permute.xlu0 %583
        %v585 = vsel %vm368, %v582, %v584
        %v589 = vsel %vm368, 0.0, %v582
        %v590 = vsel %vm368, %v584, 0.0
        %v591 = vsel %vm377, %v589, 0.0
        %v592 = vsel %vm378, %v585, 0.0
        %595 = vrot.lane.b32.xlu0 %v589, 126
        %v596 = vpop.permute.xlu0 %595
        %597 = vrot.lane.b32.xlu0 %v585, 126
        %v598 = vpop.permute.xlu0 %597
        %599 = vrot.lane.b32.xlu0 %v590, 126
        %v600 = vpop.permute.xlu0 %599
        %v601 = vsel %vm393, %v596, %v598
        %v602 = vsel %vm393, %v598, %v600
        %v605 = vsel %vm383, %v601, 0.0
        %v606 = vsel %vm384, %v602, 0.0
        %607 = vrot.lane.b32.xlu0 %v589, 112
        %v608 = vpop.permute.xlu0 %607
        %609 = vrot.lane.b32.xlu0 %v585, 112
        %v610 = vpop.permute.xlu0 %609
        %611 = vrot.lane.b32.xlu0 %v590, 112
        %v612 = vpop.permute.xlu0 %611
        %v613 = vsel %vm406, %v608, %v610
        %v614 = vsel %vm406, %v610, %v612
        %v617 = vsel %vm377, %v613, 0.0
        %v618 = vsel %vm378, %v614, 0.0
        %619 = vrot.lane.b32.xlu0 %v589, 110
        %v620 = vpop.permute.xlu0 %619
        %621 = vrot.lane.b32.xlu0 %v585, 110
        %v622 = vpop.permute.xlu0 %621
        %623 = vrot.lane.b32.xlu0 %v590, 110
        %v624 = vpop.permute.xlu0 %623
        %v625 = vsel %vm419, %v620, %v622
        %v626 = vsel %vm419, %v622, %v624
        %v629 = vsel %vm383, %v625, 0.0
        %v630 = vsel %vm384, %v626, 0.0
        %631 = vrot.lane.b32.xlu0 %v589, 96
        %v632 = vpop.permute.xlu0 %631
        %633 = vrot.lane.b32.xlu0 %v585, 96
        %v634 = vpop.permute.xlu0 %633
        %635 = vrot.lane.b32.xlu0 %v590, 96
        %v636 = vpop.permute.xlu0 %635
        %v637 = vsel %vm432, %v632, %v634
        %v638 = vsel %vm432, %v634, %v636
        %v641 = vsel %vm377, %v637, 0.0
        %v642 = vsel %vm378, %v638, 0.0
        %643 = vrot.lane.b32.xlu0 %v589, 94
        %v644 = vpop.permute.xlu0 %643
        %645 = vrot.lane.b32.xlu0 %v585, 94
        %v646 = vpop.permute.xlu0 %645
        %647 = vrot.lane.b32.xlu0 %v590, 94
        %v648 = vpop.permute.xlu0 %647
        %v649 = vsel %vm445, %v644, %v646
        %v650 = vsel %vm445, %v646, %v648
        %v653 = vsel %vm383, %v649, 0.0
        %v654 = vsel %vm384, %v650, 0.0
        %655 = vrot.lane.b32.xlu0 %v589, 127
        %v656 = vpop.permute.xlu0 %655
        %657 = vrot.lane.b32.xlu0 %v585, 127
        %v658 = vpop.permute.xlu0 %657
        %659 = vrot.lane.b32.xlu0 %v590, 127
        %v660 = vpop.permute.xlu0 %659
        %v661 = vsel %vm458, %v656, %v658
        %v662 = vsel %vm458, %v658, %v660
        %665 = vrot.lane.b32.xlu0 %v589, 111
        %v666 = vpop.permute.xlu0 %665
        %667 = vrot.lane.b32.xlu0 %v585, 111
        %v668 = vpop.permute.xlu0 %667
        %669 = vrot.lane.b32.xlu0 %v590, 111
        %v670 = vpop.permute.xlu0 %669
        %v671 = vsel %vm469, %v666, %v668
        %v672 = vsel %vm469, %v668, %v670
        %675 = vrot.lane.b32.xlu0 %v589, 95
        %v676 = vpop.permute.xlu0 %675
        %677 = vrot.lane.b32.xlu0 %v585, 95
        %v678 = vpop.permute.xlu0 %677
        %679 = vrot.lane.b32.xlu0 %v590, 95
        %v680 = vpop.permute.xlu0 %679
        %v681 = vsel %vm480, %v676, %v678
        %v682 = vsel %vm480, %v678, %v680
        %v686 = vsel %vm485, %v578, 0
        %688 = vmatprep.subr.mxu0 %v592
        %689 = vmatpush1.msra.mxu0 %v591
        %690 = vmatprep.subr.mxu0 %v662
        %691 = vmatpush1.msra.mxu0 %v661
        %692 = vmatprep.subr.mxu0 %v606
        %693 = vmatpush1.msra.mxu0 %v605
        %694 = vmatprep.subr.mxu0 %v618
        %695 = vmatpush1.msra.mxu0 %v617
        %696 = vmatprep.subr.mxu0 %v672
        %697 = vmatpush1.msra.mxu0 %v671
        %698 = vmatprep.subr.mxu0 %v630
        %699 = vmatpush1.msra.mxu0 %v629
        %700 = vmatprep.subr.mxu0 %v642
        %701 = vmatpush1.msra.mxu0 %v641
        %702 = vmatprep.subr.mxu0 %v682
        %703 = vmatpush1.msra.mxu0 %v681
        %704 = vmatprep.subr.mxu0 %v654
        %705 = vmatpush1.msra.mxu0 %v653
        %706 = vmatprep.subr.mxu0 0.0
        %707 = vmatpush1.msra.mxu0 0.0
        %708 = vmatprep.subr.mxu0 0.0
        %709 = vmatpush1.msra.mxu0 0.0
        %710 = vmatprep.subr.mxu0 0.0
        %711 = vmatpush1.msra.mxu0 0.0
        %712 = vmatprep.subr.mxu0 0.0
        %713 = vmatpush1.msra.mxu0 0.0
        %714 = vmatprep.subr.mxu0 0.0
        %715 = vmatpush1.msra.mxu0 0.0
        %716 = vmatprep.subr.mxu0 0.0
        %717 = vmatpush1.msra.mxu0 0.0
        %718 = vmatprep.subr.mxu0 0.0
        %719 = vmatpush1.msra.mxu0 0.0
        %720 = vmatprep.subr.mxu0 0.0
        %721 = vmatpush1.msra.mxu0 0.0
        %722 = vmatprep.subr.mxu0 0.0
        %723 = vmatpush1.msra.mxu0 0.0
        %724 = vmatprep.subr.mxu0 0.0
        %725 = vmatpush1.msra.mxu0 0.0
        %726 = vmatprep.subr.mxu0 0.0
        %727 = vmatpush1.msra.mxu0 0.0
        %728 = vmatprep.subr.mxu0 0.0
        %729 = vmatpush1.msra.mxu0 0.0
        %730 = vmatprep.subr.mxu0 0.0
        %731 = vmatpush1.msra.mxu0 0.0
        %732 = vmatprep.subr.mxu0 0.0
        %733 = vmatpush1.msra.mxu0 0.0
        %734 = vmatprep.subr.mxu0 0.0
        %735 = vmatpush1.msra.mxu0 0.0
        %736 = vmatprep.subr.mxu0 0.0
        %737 = vmatpush1.msra.mxu0 0.0
        %738 = vmatprep.subr.mxu0 0.0
        %739 = vmatpush1.msra.mxu0 0.0
        %740 = vmatprep.subr.mxu0 0.0
        %741 = vmatpush1.msra.mxu0 0.0
        %742 = vmatprep.subr.mxu0 0.0
        %743 = vmatpush1.msra.mxu0 0.0
        %744 = vmatprep.subr.mxu0 0.0
        %745 = vmatpush1.msra.mxu0 0.0
        %746 = vmatprep.subr.mxu0 0.0
        %747 = vmatpush1.msra.mxu0 0.0
        %748 = vmatprep.subr.mxu0 0.0
        %749 = vmatpush1.msra.mxu0 0.0
        %750 = vmatprep.subr.mxu0 0.0
        %751 = vmatpush1.msra.mxu0 0.0
        %752 = vmatprep.mubr.f32.mxu0 0.0
        %753 = vmatmul.mubr.f32.gmra.mrb[0].mxu0 %v686
        %v754 = vpop.f32.mrb[0].mxu0
        %v755 = vadd.f32 0.0, %v754
        %v756 = vpop.f32.mrb[0].mxu0
        %v757 = vadd.f32 0.0, %v756
        %758 = vdwg.mxu0
        %v759 = vld [vmem:[%s5] sm:$0xff]
        %761 = vset.pattern.permute.xlu0 0
        %762 = vperm.xlu0 %761, %v759
        %v763 = vpop.permute.xlu0 %762
        %v765 = vmul.f32 %v755, %v763
        %v766 = vmul.f32 %v757, %v763
        %v767 = vld [vmem:[%s6] sm:$0xff]
        %769 = vset.pattern.permute.xlu0 0
        %770 = vperm.xlu0 %769, %v767
        %v771 = vpop.permute.xlu0 %770
        %v773 = vadd.f32 %v765, %v771
        %v774 = vadd.f32 %v766, %v771
        %v775 = vadd.f32 %v773, %v328
        %v776 = vadd.f32 %v774, %v329
        %777 = vst [vmem:[%s315] sm:$0xff] %v775
        %778 = vst [vmem:[%s315 + $0x8] sm:$0xff] %v776
        %v779 = vmax.f32 %v775, 0.0
        %v780 = vmax.f32 %v776, 0.0
        %781 = vst [vmem:[%s322] sm:$0xff] %v779
        %782 = vst [vmem:[%s322 + $0x8] sm:$0xff] %v780
        %s783 = sand.u32 %s187, 1
        %s784 = scalar_lea.sflag [#allocation4], %s783
        %s785 = sand.u32 %s187, 1
        %s786 = smul.addr %s785, 16
        %s787 = scalar_lea.vmem [#allocation5], %s786
        %s788 = sand.u32 %s213, 1
        %s789 = scalar_lea.sflag [#allocation7], %s788
        %s790 = sand.u32 %s213, 1
        %s791 = smul.addr %s790, 16
        %s792 = scalar_lea.vmem [#allocation6], %s791
        // Predicated region
        $region53: #{tpu_custom_call.1} parent=47 // pred_check
          %p793 = pneg %p197
        $region54: #{tpu_custom_call.1} parent=47 // pred_check_branch
          %795 = sbr.rel (%p793) target = $region56
        $region55: #{tpu_custom_call.1} parent=47 // pred_region
          %s797 = ssub.s32 256, 256
          %798 = vsyncadd %s784, %s797
          %s799 = smul.addr %s27, 2
          %s800 = smul.addr %s799, 128
          %s801 = scalar_lea.hbm %s7, %s800
          %s803 = sshll.u32 %s787, 4
          %s804 = int_to_ptr.vmem [resolvable:$true] %s803
          %806 = dma.vmem_to_hbm [thread:$0]  %s804, 256, %s801, %s784
        $region56: #{tpu_custom_call.1} parent=47 // pred_fallthru
          _
        // Predicated region
        $region57: #{tpu_custom_call.1} parent=47 // pred_check
          %p807 = pneg %p223
        $region58: #{tpu_custom_call.1} parent=47 // pred_check_branch
          %809 = sbr.rel (%p807) target = $region60
        $region59: #{tpu_custom_call.1} parent=47 // pred_region
          %s811 = ssub.s32 256, 256
          %812 = vsyncadd %s789, %s811
          %s813 = smul.addr %s27, 2
          %s814 = smul.addr %s813, 128
          %s815 = scalar_lea.hbm %s8, %s814
          %s817 = sshll.u32 %s792, 4
          %s818 = int_to_ptr.vmem [resolvable:$true] %s817
          %820 = dma.vmem_to_hbm [thread:$0]  %s818, 256, %s815, %s789
        $region60: #{tpu_custom_call.1} parent=47 // pred_fallthru
          _
      $region48: #{tpu_custom_call.1} parent=5 // pred_fallthru
        _
      %p821 = scmp.le.s32.totalorder 2, %s22
      // Predicated region
      $region61: #{tpu_custom_call.1} parent=5 // pred_check
        %p822 = pneg %p821
      $region62: #{tpu_custom_call.1} parent=5 // pred_check_branch
        %824 = sbr.rel (%p822) target = $region64
      $region63: #{tpu_custom_call.1} parent=5 // pred_region
        %s825 = ssub.s32 %s22, 2
        // Predicated region
        $region65: #{tpu_custom_call.1} parent=63 // pred_check
          %p826 = pneg %p203
        $region66: #{tpu_custom_call.1} parent=63 // pred_check_branch
          %828 = sbr.rel (%p826) target = $region68
        $region67: #{tpu_custom_call.1} parent=63 // pred_region
          %s829 = sand.u32 %s188, 1
          %s830 = scalar_lea.sflag [#allocation4], %s829
          %s831 = sand.u32 %s188, 1
          %s832 = smul.addr %s831, 16
          %s833 = scalar_lea.vmem [#allocation5], %s832
          %834 = dma.done %s830, 256
        $region68: #{tpu_custom_call.1} parent=63 // pred_fallthru
          _
        // Predicated region
        $region69: #{tpu_custom_call.1} parent=63 // pred_check
          %p835 = pneg %p229
        $region70: #{tpu_custom_call.1} parent=63 // pred_check_branch
          %837 = sbr.rel (%p835) target = $region72
        $region71: #{tpu_custom_call.1} parent=63 // pred_region
          %s838 = sand.u32 %s214, 1
          %s839 = scalar_lea.sflag [#allocation7], %s838
          %s840 = sand.u32 %s214, 1
          %s841 = smul.addr %s840, 16
          %s842 = scalar_lea.vmem [#allocation6], %s841
          %843 = dma.done %s839, 256
        $region72: #{tpu_custom_call.1} parent=63 // pred_fallthru
          _
      $region64: #{tpu_custom_call.1} parent=5 // pred_fallthru
        _
    $region6: #{tpu_custom_call.1} parent=1 // loop_footer
      %s26 = sadd.s32 1, %s22
    $region7: #{tpu_custom_call.1} parent=1 // loop_footer_branch
      %21 = sbr.rel target = $region3
    $region8: #{tpu_custom_call.1} parent=1 // loop_exit
      _
    %844 = vsyncpa [#allocation3], 1
    %s845 = scalar_lea.sflag [#allocation3], 1
    %846 = vsyncpa %s845, 1
    %847 = vsyncpa [#allocation4], 1
    %s848 = scalar_lea.sflag [#allocation4], 1
    %849 = vsyncpa %s848, 1
    %850 = vsyncpa [#allocation7], 1
    %s851 = scalar_lea.sflag [#allocation7], 1
    %852 = vsyncpa %s851, 1

</llo_original>
